<compile_context>
chip_gen: v7x
topology: tpu7x:2x2x1
jax: 0.10.0
libtpu: 0.0.40
codegen_flags: <defaults>
</compile_context>

<pallas_src>
import functools
import math

import jax
import jax.numpy as jnp
from jax.experimental import pallas as pl
from jax.experimental.pallas import tpu as pltpu


def _cdiv(a, b):
    return (a + b - 1) // b


# ------------------------------- kernels ------------------------------------


def _sin_emb_kernel(offset_ref, pos_ref, consts_ref, o_ref):
    # offset_ref: (1,)        f32 SMEM   runtime offset scalar
    # pos_ref:    (1, tS, 1)  f32 VMEM   positions (sublane-major)
    # consts_ref: (2, dim)    f32 VMEM   [0]=inv_freq duplicated, [1]=phase bias
    # o_ref:      (1, tS, dim)           output tile
    pos = pos_ref[0] + offset_ref[0]                            # (tS, 1)
    phase = pos * consts_ref[0:1, :] + consts_ref[1:2, :]       # (tS, dim)
    # Single lane-dense store: sin for the first half, cos (= sin(x+pi/2)) for
    # the second half -- no masked partial stores at lane offset H.
    o_ref[0, :, :] = jnp.sin(phase).astype(o_ref.dtype)


def _sin_emb_arange_kernel(offset_ref, consts_ref, o_ref, *, tile_rows):
    # Positions are arange(S): generate them in-kernel, no position input.
    # offset_ref: (1,)      f32 SMEM
    # consts_ref: (2, dim)  f32 VMEM
    # o_ref:      (tS, dim)
    base = (pl.program_id(0) * tile_rows).astype(jnp.float32) + offset_ref[0]
    rows = jax.lax.broadcasted_iota(jnp.float32, (tile_rows, 1), 0)   # (tS, 1)
    pos = rows + base
    phase = pos * consts_ref[0:1, :] + consts_ref[1:2, :]             # (tS, dim)
    o_ref[...] = jnp.sin(phase).astype(o_ref.dtype)


# ------------------------------ tiling helpers -------------------------------

# Keep the double-buffered output tile (+ position tile) under this budget so
# the same tile choice is safe on v7x (64 MiB physical / 32 MiB scoped VMEM).
_VMEM_TILE_BUDGET = 24 * 1024 * 1024


def _choose_tile(S, dim, seq_tile, out_itemsize, force_min_tiles):
    # Cap the tile by the VMEM budget (double-buffered out row + pos row).
    bytes_per_row = 2 * (dim * out_itemsize + 4)
    max_ts = max(8, (_VMEM_TILE_BUDGET // bytes_per_row // 8) * 8)
    seq_tile = max(8, min(seq_tile, max_ts))

    n_blocks = max(force_min_tiles, _cdiv(S, seq_tile))
    if n_blocks <= 1:
        return S, 1
    # Pick tS (multiple of 8) so the last block is near-full.
    tS = ((_cdiv(S, n_blocks) + 7) // 8) * 8
    if tS >= S:
        return S, 1
    return tS, _cdiv(S, tS)


def _vmem_limit_bytes(tS, dim, out_itemsize, has_pos_input):
    need = 2 * tS * dim * out_itemsize          # double-buffered output
    if has_pos_input:
        need += 2 * tS * 4                      # double-buffered positions
    need += 2 * dim * 4 + (1 << 14)             # resident constants + slack
    return int(min(48 * 1024 * 1024, max(2 * need, 16 * 1024 * 1024)))


# ------------------------------- wrappers ------------------------------------


def sinusoidal_embedding(pos, consts, offset=0.0, *, seq_tile=1024,
                         out_dtype=jnp.float32):
    """pos: (B, S) positions. consts: (2, dim). Returns (B, S, dim)."""
    B, S = pos.shape
    dim = consts.shape[1]
    out_itemsize = jnp.dtype(out_dtype).itemsize

    # On v7x (2 TCs/chip) a (1, 1) grid leaves a core idle; force >= 2 seq
    # tiles for single-sequence calls so the parallel axis can shard.
    force_min = 2 if (B == 1 and S >= 16) else 1
    tS, n_s = _choose_tile(S, dim, seq_tile, out_itemsize, force_min)

    pos3 = pos.astype(jnp.float32).reshape(B, S, 1)
    off1 = jnp.asarray(offset, jnp.float32).reshape(1)   # runtime SMEM scalar

    cost = pl.CostEstimate(
        flops=2 * B * S * dim,                 # mul + add per output element
        transcendentals=B * S * dim,           # one sin per output element
        bytes_accessed=B * S * (4 + dim * out_itemsize) + 2 * dim * 4 + 4,
    )

    return pl.pallas_call(
        _sin_emb_kernel,
        out_shape=jax.ShapeDtypeStruct((B, S, dim), out_dtype),
        grid=(B, n_s),
        in_specs=[
            pl.BlockSpec(memory_space=pltpu.MemorySpace.SMEM),    # offset
            pl.BlockSpec((1, tS, 1), lambda b, s: (b, s, 0)),     # positions
            pl.BlockSpec((2, dim), lambda b, s: (0, 0)),          # constants
        ],
        out_specs=pl.BlockSpec((1, tS, dim), lambda b, s: (b, s, 0)),
        compiler_params=pltpu.CompilerParams(
            dimension_semantics=("parallel", "parallel"),
            vmem_limit_bytes=_vmem_limit_bytes(tS, dim, out_itemsize, True)),
        cost_estimate=cost,
    )(off1, pos3, consts)


def sinusoidal_embedding_arange(S, consts, offset=0.0, *, seq_tile=1024,
                                out_dtype=jnp.float32):
    """Positions = arange(S), generated in-kernel. Returns (S, dim)."""
    dim = consts.shape[1]
    out_itemsize = jnp.dtype(out_dtype).itemsize
    force_min = 2 if S >= 16 else 1
    tS, n_s = _choose_tile(S, dim, seq_tile, out_itemsize, force_min)

    off1 = jnp.asarray(offset, jnp.float32).reshape(1)
    kern = functools.partial(_sin_emb_arange_kernel, tile_rows=tS)

    cost = pl.CostEstimate(
        flops=2 * S * dim,
        transcendentals=S * dim,
        bytes_accessed=S * dim * out_itemsize + 2 * dim * 4 + 4,
    )

    return pl.pallas_call(
        kern,
        out_shape=jax.ShapeDtypeStruct((S, dim), out_dtype),
        grid=(n_s,),
        in_specs=[
            pl.BlockSpec(memory_space=pltpu.MemorySpace.SMEM),   # offset
            pl.BlockSpec((2, dim), lambda s: (0, 0)),            # constants
        ],
        out_specs=pl.BlockSpec((tS, dim), lambda s: (s, 0)),
        compiler_params=pltpu.CompilerParams(
            dimension_semantics=("parallel",),
            vmem_limit_bytes=_vmem_limit_bytes(tS, dim, out_itemsize, False)),
        cost_estimate=cost,
    )(off1, consts)


# ------------------------------ module wrapper --------------------------------


class SinusoidalEmbeddingPallas:
    """Mirrors the PyTorch module's __init__/forward."""

    def __init__(self, dim: int, theta: float = 10000.0, freq_scale: float = 1.0,
                 with_positions: bool = False):
        assert dim % 2 == 0
        self.dim = dim
        self.theta = theta
        self.freq_scale = jnp.ones((1,), jnp.float32) * freq_scale
        half_dim = dim // 2
        freq_seq = jnp.arange(half_dim, dtype=jnp.float32) / half_dim
        self.inv_freq = (theta ** (-freq_seq)).astype(jnp.float32)
        # Fold freq_scale in, duplicate across both halves, and pair with a
        # pi/2 phase bias so cos(x) = sin(x + pi/2) -> one full-width store.
        inv_scaled = self.inv_freq * jnp.float32(freq_scale)
        inv_dup = jnp.concatenate([inv_scaled, inv_scaled])                 # (dim,)
        phase_bias = jnp.concatenate(
            [jnp.zeros((half_dim,), jnp.float32),
             jnp.full((half_dim,), math.pi / 2, jnp.float32)])              # (dim,)
        self.consts = jnp.stack([inv_dup, phase_bias]).astype(jnp.float32)  # (2, dim)
        self.with_positions = with_positions

    def __call__(self, x, is_pos: bool = True, seq_dim: int = 1, offset: float = 0.0,
                 *, seq_tile: int = 1024, out_dtype=jnp.float32):
        if is_pos:
            pos = x
            if pos.ndim == 1:
                emb = sinusoidal_embedding(pos[None, :], self.consts, offset,
                                           seq_tile=seq_tile, out_dtype=out_dtype)[0]
                if self.with_positions:
                    p = pos.astype(jnp.float32) + offset
                    return jnp.concatenate([p[:, None].astype(emb.dtype), emb], axis=-1)
                return emb
            emb = sinusoidal_embedding(pos, self.consts, offset,
                                       seq_tile=seq_tile, out_dtype=out_dtype)
            if self.with_positions:
                # TODO(synk): torch's with_positions path assumes 1-D pos; batched pos unsupported.
                raise NotImplementedError("with_positions requires 1-D positions")
            return emb
        # is_pos=False: positions are arange over the sequence axis -> (S, dim)
        S = x.shape[seq_dim]
        emb = sinusoidal_embedding_arange(S, self.consts, offset,
                                          seq_tile=seq_tile, out_dtype=out_dtype)
        if self.with_positions:
            p = jnp.arange(S, dtype=jnp.float32) + offset
            return jnp.concatenate([p[:, None].astype(emb.dtype), emb], axis=-1)
        return emb


# --------------------------------- reference ----------------------------------


def _reference(pos, inv_freq, freq_scale, offset=0.0):
    p = pos.astype(jnp.float32) + offset
    emb = p[..., None] * (freq_scale * inv_freq)
    return jnp.concatenate([jnp.sin(emb), jnp.cos(emb)], axis=-1)


if __name__ == "__main__":
    key = jax.random.PRNGKey(0)
    B, S, DIM = 2, 8, 32

    mod = SinusoidalEmbeddingPallas(dim=DIM, theta=10000.0, freq_scale=1.0)

    # 1) positions-as-input path (is_pos=True): float positions, shape (B, S)
    pos = jax.random.uniform(key, (B, S), jnp.float32, minval=0.0, maxval=50.0)
    out = jax.block_until_ready(mod(pos, is_pos=True, offset=0.5))
    ref = _reference(pos, mod.inv_freq, mod.freq_scale[0], offset=0.5)
    assert out.shape == (B, S, DIM)
    assert jnp.allclose(out, ref, atol=1e-4, rtol=1e-4)

    # 2) is_pos=False path: x is (B, S_seq, C) -> emb over arange(S_seq), (S_seq, dim)
    x_tok = jax.random.normal(jax.random.PRNGKey(1), (2, 8, 4), jnp.float32)
    out2 = jax.block_until_ready(mod(x_tok, is_pos=False, seq_dim=1))
    ref2 = _reference(jnp.arange(8, dtype=jnp.float32), mod.inv_freq, mod.freq_scale[0])
    assert out2.shape == (8, DIM)
    assert jnp.allclose(out2, ref2, atol=1e-4, rtol=1e-4)

    # 3) exercise the tiled sequence path (grid = (B, S/tS)): S=32, tile=16
    pos_t = jax.random.uniform(jax.random.PRNGKey(2), (2, 32), jnp.float32,
                               minval=0.0, maxval=50.0)
    out3 = jax.block_until_ready(mod(pos_t, is_pos=True, offset=3.0, seq_tile=16))
    ref3 = _reference(pos_t, mod.inv_freq, mod.freq_scale[0], offset=3.0)
    assert out3.shape == (2, 32, DIM)
    assert jnp.allclose(out3, ref3, atol=1e-4, rtol=1e-4)

    # 4) with_positions=True on the arange path (torch assumes 1-D positions)
    mod_wp = SinusoidalEmbeddingPallas(dim=DIM, theta=10000.0, freq_scale=1.0,
                                       with_positions=True)
    out4 = jax.block_until_ready(mod_wp(x_tok, is_pos=False, seq_dim=1, offset=1.0))
    p4 = jnp.arange(8, dtype=jnp.float32) + 1.0
    ref4 = jnp.concatenate([p4[:, None],
                            _reference(jnp.arange(8, dtype=jnp.float32),
                                       mod_wp.inv_freq, mod_wp.freq_scale[0],
                                       offset=1.0)], axis=-1)
    assert out4.shape == (8, DIM + 1)
    assert jnp.allclose(out4, ref4, atol=1e-4, rtol=1e-4)

    print("KERNEL_OK")
</pallas_src>

<mosaic_0001>
module attributes {stable_mosaic.version = 11 : i64} {
  func.func @_sin_emb_kernel(%arg0: i32, %arg1: i32, %arg2: memref<1xf32, #tpu.memory_space<smem>>, %arg3: memref<1x8x1xf32, #tpu.memory_space<vmem>>, %arg4: memref<2x32xf32, #tpu.memory_space<vmem>>, %arg5: memref<1x8x32xf32, #tpu.memory_space<vmem>>) attributes {dimension_semantics = [#tpu.dimension_semantics<parallel>, #tpu.dimension_semantics<parallel>], iteration_bounds = array<i64: 2, 1>, scalar_prefetch = 0 : i64, scratch_operands = 0 : i64, tpu.core_type = #tpu.core_type<tc>, window_params = [{transform_indices = @transform_0, window_bounds = array<i64: 1>}, {transform_indices = @transform_1, window_bounds = array<i64: 1, 8, 1>}, {pipeline_mode = #tpu.pipeline_mode<synchronous>, transform_indices = @transform_2, window_bounds = array<i64: 2, 32>}, {transform_indices = @transform_3, window_bounds = array<i64: 1, 8, 32>}]} {
    %c0 = arith.constant 0 : index
    %c0_0 = arith.constant 0 : index
    %c0_1 = arith.constant 0 : index
    %0 = vector.load %arg3[%c0, %c0_0, %c0_1] : memref<1x8x1xf32, #tpu.memory_space<vmem>>, vector<1x8x1xf32>
    %1 = vector.shape_cast %0 : vector<1x8x1xf32> to vector<8x1xf32>
    %c0_2 = arith.constant 0 : index
    %2 = memref.load %arg2[%c0_2] : memref<1xf32, #tpu.memory_space<smem>>
    %3 = vector.broadcast %2 : f32 to vector<8x1xf32>
    %4 = arith.addf %1, %3 : vector<8x1xf32>
    %c0_3 = arith.constant 0 : index
    %c0_4 = arith.constant 0 : index
    %5 = vector.load %arg4[%c0_3, %c0_4] : memref<2x32xf32, #tpu.memory_space<vmem>>, vector<1x32xf32>
    %6 = vector.broadcast %4 : vector<8x1xf32> to vector<8x32xf32>
    %7 = vector.broadcast %5 : vector<1x32xf32> to vector<8x32xf32>
    %8 = arith.mulf %6, %7 : vector<8x32xf32>
    %c1 = arith.constant 1 : index
    %c0_5 = arith.constant 0 : index
    %9 = vector.load %arg4[%c1, %c0_5] : memref<2x32xf32, #tpu.memory_space<vmem>>, vector<1x32xf32>
    %10 = vector.broadcast %9 : vector<1x32xf32> to vector<8x32xf32>
    %11 = arith.addf %8, %10 : vector<8x32xf32>
    %12 = math.sin %11 : vector<8x32xf32>
    %c0_6 = arith.constant 0 : index
    %c0_7 = arith.constant 0 : index
    %c0_8 = arith.constant 0 : index
    %13 = vector.load %arg5[%c0_6, %c0_7, %c0_8] : memref<1x8x32xf32, #tpu.memory_space<vmem>>, vector<1x8x32xf32>
    %14 = vector.shape_cast %13 : vector<1x8x32xf32> to vector<8x32xf32>
    %15 = vector.shape_cast %12 : vector<8x32xf32> to vector<1x8x32xf32>
    tpu.vector_store %arg5[%c0_6, %c0_7, %c0_8], %15 {strides = array<i32>} : memref<1x8x32xf32, #tpu.memory_space<vmem>>, vector<1x8x32xf32>,
    return
  }
  func.func @transform_0(%arg0: i32, %arg1: i32) -> i32 {
    %c0_i32 = arith.constant 0 : i32
    %c0_i32_0 = arith.constant 0 : i32
    return %c0_i32 : i32
  }
  func.func @transform_1(%arg0: i32, %arg1: i32) -> (i32, i32, i32) {
    %c0_i32 = arith.constant 0 : i32
    %c0_i32_0 = arith.constant 0 : i32
    return %arg0, %arg1, %c0_i32 : i32, i32, i32
  }
  func.func @transform_2(%arg0: i32, %arg1: i32) -> (i32, i32) {
    %c0_i32 = arith.constant 0 : i32
    %c0_i32_0 = arith.constant 0 : i32
    %c0_i32_1 = arith.constant 0 : i32
    return %c0_i32, %c0_i32_0 : i32, i32
  }
  func.func @transform_3(%arg0: i32, %arg1: i32) -> (i32, i32, i32) {
    %c0_i32 = arith.constant 0 : i32
    %c0_i32_0 = arith.constant 0 : i32
    return %arg0, %arg1, %c0_i32 : i32, i32, i32
  }
}

</mosaic_0001>

<llo_original>
// kernel: tpu_custom_call.1
$region0: #{tpu_custom_call.1}
  #allocation0 [shape = 'u32[]', space=smem, size = 0x4, offset = 0x4, fixed_abs, tag = 'smem constant byte address 0x4 - core index']
  #allocation1 [shape = 'u32[144,128]{1,0:T(1,128)}', space=vmem, size = 0x12000, scoped, tag = 'internal scratch']
  #allocation2 [shape = 'f32[1]{0:T(128)S(6)}', space=smem, size = 0x200, scoped, tag = 'scoped memory for tpu_custom_call.1']
  %s0 = inlined_call_operand.<no memory space> [shape: f32[1], index: 0, kind: input, shape index: {}]
  %s1 = inlined_call_operand.vmem [shape: f32[2,8,1], index: 1, kind: input, shape index: {}]
  %s2 = inlined_call_operand.vmem [shape: f32[2,32], index: 2, kind: input, shape index: {}]
  %s3 = inlined_call_operand.hbm [shape: f32[2,8,32], index: 3, kind: output, shape index: {}]
  %s4 = sld [smem:[#allocation0]]
  $region45: #{tpu_custom_call.1} parent=0
    _
  %s6 = ssub.s32 1, %s4
  %s7 = scalar_select 0, %s6, %s4
  %8 = sst [smem:[#allocation2]] %s0
  $region1: #{tpu_custom_call.1} parent=0
    #allocation3 [shape = 'u8[8192]{0}', space=vmem, size = 0x2000, scoped, tag = 'output window, operand 0']
    #allocation4 [shape = 's32[2]{0}', space=sflag, size = 0x8, scoped, tag = 'scoped memory for tpu_custom_call.1']
    %9 = vsyncpa [#allocation4], 0
    %s10 = scalar_lea.sflag [#allocation4], 1
    %11 = vsyncpa %s10, 0
    loop: start=0, step=1, limit=4
    $region2: #{tpu_custom_call.1} parent=1 // loop_pre_header
      _
    $region3: #{tpu_custom_call.1} parent=1 // loop_header
      %s13 = sphi 0, %s17
      %p14 = scmp.ge.s32.totalorder %s13, 4
      %s20 = sphi 0, %s32
      %s21 = sphi 0, %s28
      %s22 = sphi 0, %s20
      %s23 = sphi 0, %s21
      %s24 = sphi 0, %s22
      %s25 = sphi 0, %s23
      %s33 = sphi 0, %s33
      %s35 = sphi 0, %s33
      %s36 = sphi 0, %s35
      %s50 = sphi 0, %s36
      %s58 = sphi 0, %s60
      %s61 = sphi 0, %s58
      %s62 = sphi 0, %s61
      %s78 = sphi 0, %s62
      %s82 = sphi 0, %s82
      %s84 = sphi 0, %s82
      %s85 = sphi 0, %s84
      %s99 = sphi 0, %s85
      %s107 = sphi 0, %s109
      %s110 = sphi 0, %s107
      %s111 = sphi 0, %s110
      %s127 = sphi 0, %s111
    $region4: #{tpu_custom_call.1} parent=1 // loop_header_branch
      %16 = sbr.rel (%p14) target = $region8
    $region5: #{tpu_custom_call.1} parent=1 // loop_body
      %s18 = ssub.s32 %s13, 1
      %s19 = ssub.s32 %s13, 2
      %s26 = sadd.s32 1, %s21
      %p27 = scmp.ge.s32.totalorder %s26, 1
      %s28 = scalar_select %p27, 0, %s26
      %s29 = sadd.s32 1, %s20
      %s30 = scalar_select %p27, %s29, %s20
      %p31 = scmp.ge.s32.totalorder %s30, 2
      %s32 = scalar_select %p31, 0, %s30
      %s34 = sadd.s32 %s33, 1
      %p37 = scmp.eq.s32.totalorder %s13, 1
      %p38 = scmp.ne.s32.totalorder %s33, %s35
      %p39 = scmp.eq.s32.totalorder %s13, 0
      %p40 = por %p38, %p39
      %p41 = scmp.ne.s32.totalorder %s33, %s35
      %p42 = scmp.eq.s32.totalorder %s18, 1
      %p43 = por %p41, %p42
      %p44 = scmp.ne.s32.totalorder %s35, %s36
      %p45 = scmp.eq.s32.totalorder %s18, 0
      %p46 = por %p44, %p45
      %p47 = scmp.ne.s32.totalorder %s35, %s36
      %p48 = scmp.eq.s32.totalorder %s19, 1
      %p49 = por %p47, %p48
      %p51 = scmp.ne.s32.totalorder %s36, %s50
      %p52 = scmp.eq.s32.totalorder %s19, 0
      %p53 = por %p51, %p52
      %s54 = ssub.s32 %s20, %s32
      %s55 = ssub.s32 %s21, %s28
      %s56 = sor.u32 %s54, %s55
      %p57 = scmp.eq.s32.totalorder %s56, 0
      %s59 = sadd.s32 %s58, 1
      %s60 = scalar_select %p57, %s58, %s59
      %p63 = pneg %p57
      %p64 = scmp.eq.s32.totalorder %s13, 1
      %p65 = por %p63, %p64
      %p66 = scmp.ne.s32.totalorder %s58, %s61
      %p67 = scmp.eq.s32.totalorder %s13, 0
      %p68 = por %p66, %p67
      %p69 = scmp.ne.s32.totalorder %s58, %s61
      %p70 = scmp.eq.s32.totalorder %s18, 1
      %p71 = por %p69, %p70
      %p72 = scmp.ne.s32.totalorder %s61, %s62
      %p73 = scmp.eq.s32.totalorder %s18, 0
      %p74 = por %p72, %p73
      %p75 = scmp.ne.s32.totalorder %s61, %s62
      %p76 = scmp.eq.s32.totalorder %s19, 1
      %p77 = por %p75, %p76
      %p79 = scmp.ne.s32.totalorder %s62, %s78
      %p80 = scmp.eq.s32.totalorder %s19, 0
      %p81 = por %p79, %p80
      %s83 = sadd.s32 %s82, 1
      %p86 = scmp.eq.s32.totalorder %s13, 1
      %p87 = scmp.ne.s32.totalorder %s82, %s84
      %p88 = scmp.eq.s32.totalorder %s13, 0
      %p89 = por %p87, %p88
      %p90 = scmp.ne.s32.totalorder %s82, %s84
      %p91 = scmp.eq.s32.totalorder %s18, 1
      %p92 = por %p90, %p91
      %p93 = scmp.ne.s32.totalorder %s84, %s85
      %p94 = scmp.eq.s32.totalorder %s18, 0
      %p95 = por %p93, %p94
      %p96 = scmp.ne.s32.totalorder %s84, %s85
      %p97 = scmp.eq.s32.totalorder %s19, 1
      %p98 = por %p96, %p97
      %p100 = scmp.ne.s32.totalorder %s85, %s99
      %p101 = scmp.eq.s32.totalorder %s19, 0
      %p102 = por %p100, %p101
      %s103 = ssub.s32 %s20, %s32
      %s104 = ssub.s32 %s21, %s28
      %s105 = sor.u32 %s103, %s104
      %p106 = scmp.eq.s32.totalorder %s105, 0
      %s108 = sadd.s32 %s107, 1
      %s109 = scalar_select %p106, %s107, %s108
      %p112 = pneg %p106
      %p113 = scmp.eq.s32.totalorder %s13, 1
      %p114 = por %p112, %p113
      %p115 = scmp.ne.s32.totalorder %s107, %s110
      %p116 = scmp.eq.s32.totalorder %s13, 0
      %p117 = por %p115, %p116
      %p118 = scmp.ne.s32.totalorder %s107, %s110
      %p119 = scmp.eq.s32.totalorder %s18, 1
      %p120 = por %p118, %p119
      %p121 = scmp.ne.s32.totalorder %s110, %s111
      %p122 = scmp.eq.s32.totalorder %s18, 0
      %p123 = por %p121, %p122
      %p124 = scmp.ne.s32.totalorder %s110, %s111
      %p125 = scmp.eq.s32.totalorder %s19, 1
      %p126 = por %p124, %p125
      %p128 = scmp.ne.s32.totalorder %s111, %s127
      %p129 = scmp.eq.s32.totalorder %s19, 0
      %p130 = por %p128, %p129
      %p131 = scmp.le.s32.totalorder 1, %s13
      %p132 = scmp.lt.s32.totalorder %s13, 3
      %p133 = pnand %p131, %p132
      %p134 = pneg %p133
      // Predicated region
      $region9: #{tpu_custom_call.1} parent=5 // pred_check
        _
      $region10: #{tpu_custom_call.1} parent=5 // pred_check_branch
        %136 = sbr.rel (%p133) target = $region12
      $region11: #{tpu_custom_call.1} parent=5 // pred_region
        %s137 = ssub.s32 %s13, 1
        // Predicated region
        $region13: #{tpu_custom_call.1} parent=11 // pred_check
          %p138 = pneg %p46
        $region14: #{tpu_custom_call.1} parent=11 // pred_check_branch
          %140 = sbr.rel (%p138) target = $region16
        $region15: #{tpu_custom_call.1} parent=11 // pred_region
          _
        $region16: #{tpu_custom_call.1} parent=11 // pred_fallthru
          _
        // Predicated region
        $region17: #{tpu_custom_call.1} parent=11 // pred_check
          %p141 = pneg %p95
        $region18: #{tpu_custom_call.1} parent=11 // pred_check_branch
          %143 = sbr.rel (%p141) target = $region20
        $region19: #{tpu_custom_call.1} parent=11 // pred_region
          _
        $region20: #{tpu_custom_call.1} parent=11 // pred_fallthru
          _
      $region12: #{tpu_custom_call.1} parent=5 // pred_fallthru
        _
      %p144 = scmp.lt.s32.totalorder %s13, 2
      // Predicated region
      $region21: #{tpu_custom_call.1} parent=5 // pred_check
        %p145 = pneg %p144
      $region22: #{tpu_custom_call.1} parent=5 // pred_check_branch
        %147 = sbr.rel (%p145) target = $region24
      $region23: #{tpu_custom_call.1} parent=5 // pred_region
        // Predicated region
        $region25: #{tpu_custom_call.1} parent=23 // pred_check
          %p148 = pneg %p68
        $region26: #{tpu_custom_call.1} parent=23 // pred_check_branch
          %150 = sbr.rel (%p148) target = $region28
        $region27: #{tpu_custom_call.1} parent=23 // pred_region
          %p151 = scmp.lt.s32.totalorder %s20, 1
          %s152 = scalar_select %p151, %s20, 1
          %p153 = scmp.lt.s32.totalorder %s21, 0
          %s154 = scalar_select %p153, %s21, 0
          %s155 = sadd.s32 %s154, %s152
          %s156 = smul.addr %s155, 8
          %s157 = scalar_lea.vmem %s1, %s156
        $region28: #{tpu_custom_call.1} parent=23 // pred_fallthru
          _
      $region24: #{tpu_custom_call.1} parent=5 // pred_fallthru
        _
      %p158 = scmp.le.s32.totalorder 1, %s13
      %p159 = scmp.lt.s32.totalorder %s13, 3
      %p160 = pnand %p158, %p159
      %p161 = pneg %p160
      // Predicated region
      $region29: #{tpu_custom_call.1} parent=5 // pred_check
        _
      $region30: #{tpu_custom_call.1} parent=5 // pred_check_branch
        %163 = sbr.rel (%p160) target = $region32
      $region31: #{tpu_custom_call.1} parent=5 // pred_region
        %s164 = ssub.s32 %s13, 1
        %p165 = pneg %p46
        %p166 = pneg %p43
        %p167 = scmp.lt.s32.totalorder %s22, 1
        %s168 = scalar_select %p167, %s22, 1
        %p169 = scmp.lt.s32.totalorder %s23, 0
        %s170 = scalar_select %p169, %s23, 0
        %s171 = sadd.s32 %s170, %s168
        %s172 = smul.addr %s171, 8
        %s173 = scalar_lea.vmem %s1, %s172
        %p174 = pneg %p74
        %p175 = pneg %p71
        %p176 = pneg %p95
        %p177 = pneg %p92
        %p178 = pneg %p123
        %p179 = pneg %p120
        %s180 = sand.u32 %s110, 1
        %s181 = scalar_lea.sflag [#allocation4], %s180
        %s182 = sand.u32 %s110, 1
        %s183 = smul.addr %s182, 8
        %s184 = scalar_lea.vmem [#allocation3], %s183
        %p185 = scmp.lt.s32.totalorder %s22, 1
        %s186 = scalar_select %p185, %s22, 1
        %p187 = scmp.lt.s32.totalorder %s23, 0
        %s188 = scalar_select %p187, %s23, 0
        %s189 = sadd.s32 %s188, %s186
        %s190 = smul.addr %s189, 8
        %s191 = scalar_lea.vmem %s1, %s190
        %v192 = vld [vmem:[%s191] sm:$0xff]
        %s193 = sld [smem:[#allocation2]]
        %v194 = vstv %s193
        %v195 = vadd.f32 %v192, %v194
        %v196 = vld [vmem:[%s2] sm:$0x1]
        %198 = vset.pattern.permute.xlu0 0
        %199 = vperm.xlu0 %198, %v195
        %v200 = vpop.permute.xlu0 %199
        %v202 = vlaneseq
        %v203 = vshrl.u32 %v202, 7
        %v204 = vsub.s32 0, %v203
        %v205 = vrot.slane %v196, %v204
        %v206 = vmul.f32 %v200, %v205
        %v207 = vld [vmem:[%s2 + $0x1] sm:$0x1]
        %v208 = vlaneseq
        %v209 = vshrl.u32 %v208, 7
        %v210 = vsub.s32 0, %v209
        %v211 = vrot.slane %v207, %v210
        %v212 = vadd.f32 %v206, %v211
        %v213 = vand.u32 2147483647, %v212
        %vm214 = vcmp.le.f32.partialorder %v213, 0.7853982
        %vm215 = vcmp.lt.s32.totalorder %v212, 0
        %v216 = vand.u32 %v212, 2139095040
        %v217 = vshrl.u32 %v216, 23
        %v218 = vsub.s32 %v217, 127
        %v219 = vand.u32 2147483647, %v212
        %v220 = vand.u32 %v219, 8388607
        %v221 = vor.u32 %v220, 8388608
        %v222 = vsub.s32 0, %v221
        %v223 = vadd.s32 %v218, 1
        %vm224 = vcmp.gt.s32.totalorder %v223, 0
        %v225 = vsel %vm224, %v223, 0
        %v226 = vshrl.u32 %v225, 5
        %v227 = vand.u32 %v225, 31
        %v228 = vsub.s32 32, %v227
        %v229 = vshrl.u32 683565275, %v228
        %v230 = vshll.u32 683565275, %v227
        %v231 = vshrl.u32 2475754826, %v228
        %v232 = vor.u32 %v230, %v231
        %v233 = vshll.u32 2475754826, %v227
        %v234 = vshrl.u32 2131351028, %v228
        %v235 = vor.u32 %v233, %v234
        %v236 = vshll.u32 2131351028, %v227
        %v237 = vshrl.u32 2102212464, %v228
        %v238 = vor.u32 %v236, %v237
        %v239 = vshll.u32 2102212464, %v227
        %v240 = vshrl.u32 920167782, %v228
        %v241 = vor.u32 %v239, %v240
        %v242 = vshll.u32 920167782, %v227
        %v243 = vshrl.u32 1326507024, %v228
        %v244 = vor.u32 %v242, %v243
        %vm245 = vcmp.lt.s32.totalorder %v226, 1
        %vm246 = vcmp.lt.s32.totalorder %v226, 2
        %vm247 = vcmp.lt.s32.totalorder %v226, 3
        %vm248 = vcmp.lt.s32.totalorder %v226, 4
        %v249 = vsel %vm245, %v229, %v232
        %v250 = vsel %vm248, %v238, 2102212464
        %v251 = vsel %vm247, %v235, %v250
        %v252 = vsel %vm246, %v249, %v251
        %v253 = vsel %vm245, %v232, %v235
        %v254 = vsel %vm248, %v241, 920167782
        %v255 = vsel %vm247, %v238, %v254
        %v256 = vsel %vm246, %v253, %v255
        %v257 = vsel %vm245, %v235, %v238
        %v258 = vsel %vm248, %v244, 1326507024
        %v259 = vsel %vm247, %v241, %v258
        %v260 = vsel %vm246, %v257, %v259
        %v261 = vshll.u32 %v221, 8
        %v262 = vmul.u32.u64.compose %v261, %v260
        %v263 = vextract.low.u32 %v262
        %v264 = vextract.high.u32 %v262
        %v265 = vmul.u32.u64.compose %v261, %v256
        %v266 = vextract.low.u32 %v265
        %v267 = vextract.high.u32 %v265
        %v268 = vmul.u32 %v261, %v252
        %v269 = vadd.s32 %v264, %v266
        %vm270 = vc.u32 %v264, %v266
        %v271 = vadd.s32 %v267, 1
        %v272 = vsel %vm270, %v271, %v267
        %v273 = vadd.s32 %v268, %v272
        %v274 = vadd.s32 %v273, 536870912
        %v275 = vshrl.u32 %v274, 30
        %v276 = vshll.u32 %v275, 30
        %v277 = vsub.s32 %v273, %v276
        %vm278 = vcmp.lt.s32.totalorder %v277, 0
        %v279 = vsub.s32 0, %v277
        %v280 = vsel %vm278, %v279, %v277
        %v281 = vclz %v280
        %v282 = vsub.s32 %v281, 2
        %vm283 = vcmp.gt.s32.totalorder 0, %v282
        %v284 = vsel %vm283, 0, %v282
        %v285 = vsub.s32 32, %v284
        %v286 = vshll.u32 %v277, %v284
        %v287 = vshrl.u32 %v269, %v285
        %v288 = vor.u32 %v286, %v287
        %v289 = vsub.s32 4294967266, %v284
        %v290 = vadd.s32 %v289, 127
        %v291 = vshll.u32 %v290, 23
        %v292 = vor.u32 4788187, %v291
        %v293 = vand.u32 2147483647, %v292
        %v295 = vcvt.s32.f32 %v288
        %v296 = vmul.f32 %v295, %v293
        %v297 = vxor.u32 %v296, 2147483648
        %v298 = vsel %vm215, %v297, %v296
        %v299 = vsub.s32 4, %v275
        %v300 = vsel %vm215, %v299, %v275
        %v301 = vsel %vm214, %v212, %v298
        %v302 = vsel %vm214, 0, %v300
        %v303 = vcosq.f32.pop %v301
        %v304 = vsinq.f32.pop %v301
        %vm305 = vweird.f32 %v212
        %v306 = vadd.s32 %v302, 3
        %v307 = vand.u32 %v306, 3
        %vm308 = vcmp.lt.s32.totalorder %v307, 2
        %vm309 = vcmp.eq.s32.totalorder %v307, 0
        %v310 = vxor.u32 %v304, 2147483648
        %v311 = vsel %vm309, %v303, %v310
        %vm312 = vcmp.eq.s32.totalorder %v307, 2
        %v313 = vxor.u32 %v303, 2147483648
        %v314 = vsel %vm312, %v313, %v304
        %v315 = vsel %vm308, %v311, %v314
        %v316 = vsel %vm305, nan, %v315
        %vm317 = vcmask 261120
        %318 = vst.msk [vmem:[%s184] sm:$0xff] %vm317, %v316
        %s319 = sand.u32 %s110, 1
        %s320 = scalar_lea.sflag [#allocation4], %s319
        %s321 = sand.u32 %s110, 1
        %s322 = smul.addr %s321, 8
        %s323 = scalar_lea.vmem [#allocation3], %s322
        // Predicated region
        $region33: #{tpu_custom_call.1} parent=31 // pred_check
          %p324 = pneg %p120
        $region34: #{tpu_custom_call.1} parent=31 // pred_check_branch
          %326 = sbr.rel (%p324) target = $region36
        $region35: #{tpu_custom_call.1} parent=31 // pred_region
          %s328 = ssub.s32 128, 128
          %329 = vsyncadd %s320, %s328
          %s330 = sadd.s32 %s23, %s22
          %s331 = smul.addr %s330, 128
          %s332 = scalar_lea.hbm %s3, %s331
          %s334 = sshll.u32 %s323, 4
          %s335 = int_to_ptr.vmem [resolvable:$true] %s334
          %337 = dma.vmem_to_hbm [thread:$0]  %s335, 128, %s332, %s320
        $region36: #{tpu_custom_call.1} parent=31 // pred_fallthru
          _
      $region32: #{tpu_custom_call.1} parent=5 // pred_fallthru
        _
      %p338 = scmp.le.s32.totalorder 2, %s13
      // Predicated region
      $region37: #{tpu_custom_call.1} parent=5 // pred_check
        %p339 = pneg %p338
      $region38: #{tpu_custom_call.1} parent=5 // pred_check_branch
        %341 = sbr.rel (%p339) target = $region40
      $region39: #{tpu_custom_call.1} parent=5 // pred_region
        %s342 = ssub.s32 %s13, 2
        // Predicated region
        $region41: #{tpu_custom_call.1} parent=39 // pred_check
          %p343 = pneg %p126
        $region42: #{tpu_custom_call.1} parent=39 // pred_check_branch
          %345 = sbr.rel (%p343) target = $region44
        $region43: #{tpu_custom_call.1} parent=39 // pred_region
          %s346 = sand.u32 %s111, 1
          %s347 = scalar_lea.sflag [#allocation4], %s346
          %s348 = sand.u32 %s111, 1
          %s349 = smul.addr %s348, 8
          %s350 = scalar_lea.vmem [#allocation3], %s349
          %351 = dma.done %s347, 128
        $region44: #{tpu_custom_call.1} parent=39 // pred_fallthru
          _
      $region40: #{tpu_custom_call.1} parent=5 // pred_fallthru
        _
    $region6: #{tpu_custom_call.1} parent=1 // loop_footer
      %s17 = sadd.s32 1, %s13
    $region7: #{tpu_custom_call.1} parent=1 // loop_footer_branch
      %12 = sbr.rel target = $region3
    $region8: #{tpu_custom_call.1} parent=1 // loop_exit
      _
    %352 = vsyncpa [#allocation4], 1
    %s353 = scalar_lea.sflag [#allocation4], 1
    %354 = vsyncpa %s353, 1

</llo_original>
